<compile_context>
chip_gen: v6e
topology: v6e:2x2x1
jax: 0.10.0
libtpu: 0.0.40
codegen_flags: <defaults>
</compile_context>

<pallas_src>
import functools

import jax
import jax.numpy as jnp
from jax import lax
from jax.experimental import pallas as pl
from jax.experimental.pallas import tpu as pltpu

_INV_SQRT2 = 0.7071067811865476


def _gelu_exact(y):
    # torch.nn.GELU default (approximate='none').
    return 0.5 * y * (1.0 + lax.erf(y * jnp.float32(_INV_SQRT2)))


def _kernel_fused(x_ref, w_ref, b_ref, o_ref):
    # Whole contraction in one tile: matmul + bias + GELU, no scratch.
    y = jnp.dot(x_ref[...], w_ref[...], preferred_element_type=jnp.float32)
    y = y + b_ref[...].astype(jnp.float32)
    o_ref[...] = _gelu_exact(y).astype(o_ref.dtype)


def _kernel_ksplit(x_ref, w_ref, b_ref, o_ref, acc_ref):
    # x_ref: (tm, tk), w_ref: (tk, tn), b_ref: (1, tn), o_ref: (tm, tn)
    # acc_ref: (tm, tn) f32 accumulator, resident across the K axis.
    k = pl.program_id(2)

    @pl.when(k == 0)
    def _():
        acc_ref[...] = jnp.zeros_like(acc_ref)

    acc_ref[...] += jnp.dot(
        x_ref[...], w_ref[...], preferred_element_type=jnp.float32
    )

    @pl.when(k == pl.num_programs(2) - 1)
    def _():
        y = acc_ref[...] + b_ref[...].astype(jnp.float32)
        o_ref[...] = _gelu_exact(y).astype(o_ref.dtype)


def _round_up(x, m):
    return ((x + m - 1) // m) * m


@functools.partial(jax.jit, static_argnames=("tm", "tn", "tk"))
def intermediate_layer(x, w_t, b, *, tm=256, tn=256, tk=512):
    """x: (B, S, H); w_t: (H, N); b: (N,) with N = H // 2.

    Returns (B, S, N) with the same dtype as x.
    """
    B, S, H = x.shape
    N = w_t.shape[1]
    M = B * S

    # --- tile sizes --------------------------------------------------------
    # Row tile: multiple of 8 (sublane); pad M up to a multiple of it.
    tm_eff = min(tm, _round_up(M, 8))
    M_pad = _round_up(M, tm_eff)
    # Lane-dim tiles: must be a 128-multiple that divides the dim, else use
    # the full dimension (always legal for a BlockSpec).
    tn_eff = tn if (tn % 128 == 0 and N % tn == 0) else N
    tk_eff = tk if (tk % 128 == 0 and H % tk == 0) else H

    x2 = x.reshape(M, H)
    if M_pad != M:
        x2 = jnp.pad(x2, ((0, M_pad - M), (0, 0)))
    b2 = b.reshape(1, N)

    grid_m = M_pad // tm_eff
    grid_n = N // tn_eff
    grid_k = H // tk_eff

    ex = jnp.dtype(x.dtype).itemsize
    ew = jnp.dtype(w_t.dtype).itemsize
    eb = jnp.dtype(b.dtype).itemsize

    cost = pl.CostEstimate(
        flops=2 * M_pad * H * N,
        transcendentals=M_pad * N,
        bytes_accessed=(M_pad * H * ex + H * N * ew + N * eb + M_pad * N * ex),
    )

    if grid_k == 1:
        # Single-K fast path: 2-D grid, no accumulator scratch.
        tile_bytes = 2 * (
            tm_eff * H * ex + H * tn_eff * ew + tn_eff * eb + tm_eff * tn_eff * ex
        )
        vmem_limit = int(min(max(tile_bytes * 2, 32 << 20), 56 << 20))
        out2 = pl.pallas_call(
            _kernel_fused,
            out_shape=jax.ShapeDtypeStruct((M_pad, N), x.dtype),
            grid_spec=pltpu.PrefetchScalarGridSpec(
                num_scalar_prefetch=0,
                grid=(grid_m, grid_n),
                in_specs=[
                    pl.BlockSpec((tm_eff, H), lambda i, j: (i, 0)),       # x
                    pl.BlockSpec((H, tn_eff), lambda i, j: (0, j)),       # W^T
                    pl.BlockSpec((1, tn_eff), lambda i, j: (0, j)),       # bias
                ],
                out_specs=pl.BlockSpec((tm_eff, tn_eff), lambda i, j: (i, j)),
            ),
            compiler_params=pltpu.CompilerParams(
                dimension_semantics=("parallel", "parallel"),
                vmem_limit_bytes=vmem_limit,
            ),
            cost_estimate=cost,
        )(x2, w_t, b2)
    else:
        tile_bytes = (
            2 * tm_eff * tk_eff * ex
            + 2 * tk_eff * tn_eff * ew
            + 2 * tn_eff * eb
            + 2 * tm_eff * tn_eff * ex
            + tm_eff * tn_eff * 4  # f32 accumulator scratch
        )
        vmem_limit = int(min(max(tile_bytes * 2, 32 << 20), 56 << 20))
        out2 = pl.pallas_call(
            _kernel_ksplit,
            out_shape=jax.ShapeDtypeStruct((M_pad, N), x.dtype),
            grid_spec=pltpu.PrefetchScalarGridSpec(
                num_scalar_prefetch=0,
                grid=(grid_m, grid_n, grid_k),
                in_specs=[
                    pl.BlockSpec((tm_eff, tk_eff), lambda i, j, k: (i, k)),  # x
                    pl.BlockSpec((tk_eff, tn_eff), lambda i, j, k: (k, j)),  # W^T
                    pl.BlockSpec((1, tn_eff), lambda i, j, k: (0, j)),       # bias
                ],
                out_specs=pl.BlockSpec((tm_eff, tn_eff), lambda i, j, k: (i, j)),
                scratch_shapes=[pltpu.VMEM((tm_eff, tn_eff), jnp.float32)],
            ),
            compiler_params=pltpu.CompilerParams(
                dimension_semantics=("parallel", "parallel", "arbitrary"),
                vmem_limit_bytes=vmem_limit,
            ),
            cost_estimate=cost,
        )(x2, w_t, b2)

    return out2[:M].reshape(B, S, N)


def _reference(x, w_t, b):
    y = jnp.einsum("bsh,hn->bsn", x, w_t, precision=lax.Precision.HIGHEST) + b
    return 0.5 * y * (1.0 + lax.erf(y * jnp.float32(_INV_SQRT2)))


if __name__ == "__main__":
    # Small shapes consistent with the module: batch=2, seq=8, hidden=32.
    batch, seq, hidden = 2, 8, 32
    inter = hidden // 2

    key = jax.random.PRNGKey(0)
    kx, kw, kb = jax.random.split(key, 3)

    x = jax.random.normal(kx, (batch, seq, hidden), dtype=jnp.float32)
    # nn.Linear param shapes: weight (inter, hidden), bias (inter,).
    w = jax.random.normal(kw, (inter, hidden), dtype=jnp.float32) * (
        1.0 / jnp.sqrt(hidden)
    )
    b = jax.random.normal(kb, (inter,), dtype=jnp.float32) * 0.01
    w_t = w.T  # (hidden, inter)

    out = intermediate_layer(x, w_t, b)
    out = jax.block_until_ready(out)

    ref = _reference(x, w_t, b)
    assert out.shape == (batch, seq, inter)
    assert jnp.allclose(out, ref, atol=1e-4, rtol=1e-5)

    print("KERNEL_OK")
</pallas_src>

<mosaic_0001>
module attributes {stable_mosaic.version = 11 : i64} {
  func.func @_kernel_fused(%arg0: i32, %arg1: i32, %arg2: memref<16x32xf32, #tpu.memory_space<vmem>>, %arg3: memref<32x16xf32, #tpu.memory_space<vmem>>, %arg4: memref<1x16xf32, #tpu.memory_space<vmem>>, %arg5: memref<16x16xf32, #tpu.memory_space<vmem>>) attributes {dimension_semantics = [#tpu.dimension_semantics<parallel>, #tpu.dimension_semantics<parallel>], iteration_bounds = array<i64: 1, 1>, scalar_prefetch = 0 : i64, scratch_operands = 0 : i64, tpu.core_type = #tpu.core_type<tc>, window_params = [{transform_indices = @transform_0, window_bounds = array<i64: 16, 32>}, {transform_indices = @transform_1, window_bounds = array<i64: 32, 16>}, {transform_indices = @transform_2, window_bounds = array<i64: 1, 16>}, {transform_indices = @transform_3, window_bounds = array<i64: 16, 16>}]} {
    %c0 = arith.constant 0 : index
    %c0_0 = arith.constant 0 : index
    %0 = vector.load %arg2[%c0, %c0_0] : memref<16x32xf32, #tpu.memory_space<vmem>>, vector<16x32xf32>
    %c0_1 = arith.constant 0 : index
    %c0_2 = arith.constant 0 : index
    %1 = vector.load %arg3[%c0_1, %c0_2] : memref<32x16xf32, #tpu.memory_space<vmem>>, vector<32x16xf32>
    %cst = arith.constant dense<0.000000e+00> : vector<16x16xf32>
    %2 = tpu.matmul %0, %1, %cst {dimension_numbers = #tpu.dot_dimension_numbers<[1], [0], [0], [1], [0, 0, 1, 1], [], []>} : vector<16x32xf32>, vector<32x16xf32>, vector<16x16xf32> -> vector<16x16xf32>
    %c0_3 = arith.constant 0 : index
    %c0_4 = arith.constant 0 : index
    %3 = vector.load %arg4[%c0_3, %c0_4] : memref<1x16xf32, #tpu.memory_space<vmem>>, vector<1x16xf32>
    %4 = vector.broadcast %3 : vector<1x16xf32> to vector<16x16xf32>
    %5 = arith.addf %2, %4 : vector<16x16xf32>
    %cst_5 = arith.constant 5.000000e-01 : f32
    %6 = vector.broadcast %cst_5 : f32 to vector<16x16xf32>
    %7 = arith.mulf %6, %5 : vector<16x16xf32>
    %cst_6 = arith.constant 0.707106769 : f32
    %8 = vector.broadcast %cst_6 : f32 to vector<16x16xf32>
    %9 = arith.mulf %5, %8 : vector<16x16xf32>
    %10 = math.erf %9 : vector<16x16xf32>
    %cst_7 = arith.constant 1.000000e+00 : f32
    %11 = vector.broadcast %cst_7 : f32 to vector<16x16xf32>
    %12 = arith.addf %11, %10 : vector<16x16xf32>
    %13 = arith.mulf %7, %12 : vector<16x16xf32>
    %c0_8 = arith.constant 0 : index
    %c0_9 = arith.constant 0 : index
    %14 = vector.load %arg5[%c0_8, %c0_9] : memref<16x16xf32, #tpu.memory_space<vmem>>, vector<16x16xf32>
    tpu.vector_store %arg5[%c0_8, %c0_9], %13 {strides = array<i32>} : memref<16x16xf32, #tpu.memory_space<vmem>>, vector<16x16xf32>,
    return
  }
  func.func @transform_0(%arg0: i32, %arg1: i32) -> (i32, i32) {
    %c0_i32 = arith.constant 0 : i32
    %c0_i32_0 = arith.constant 0 : i32
    return %arg0, %c0_i32 : i32, i32
  }
  func.func @transform_1(%arg0: i32, %arg1: i32) -> (i32, i32) {
    %c0_i32 = arith.constant 0 : i32
    %c0_i32_0 = arith.constant 0 : i32
    return %c0_i32, %arg1 : i32, i32
  }
  func.func @transform_2(%arg0: i32, %arg1: i32) -> (i32, i32) {
    %c0_i32 = arith.constant 0 : i32
    %c0_i32_0 = arith.constant 0 : i32
    return %c0_i32, %arg1 : i32, i32
  }
  func.func @transform_3(%arg0: i32, %arg1: i32) -> (i32, i32) {
    %c0_i32 = arith.constant 0 : i32
    return %arg0, %arg1 : i32, i32
  }
}

</mosaic_0001>

<llo_original>
// kernel: intermediate_layer.1
$region0: #{intermediate_layer.1}
  #allocation0 [shape = 'u32[]', space=smem, size = 0x4, offset = 0x4, fixed_abs, tag = 'smem constant byte address 0x4 - core index']
  #allocation1 [shape = 'u32[144,128]{1,0:T(1,128)}', space=vmem, size = 0x12000, scoped, tag = 'internal scratch']
  %s0 = inlined_call_operand.vmem [shape: f32[16,32], index: 0, kind: input, shape index: {}]
  %s1 = inlined_call_operand.vmem [shape: f32[32,16], index: 1, kind: input, shape index: {}]
  %s2 = inlined_call_operand.vmem [shape: f32[1,16], index: 2, kind: input, shape index: {}]
  %s3 = inlined_call_operand.hbm [shape: f32[16,16], index: 3, kind: output, shape index: {}]
  %s4 = sld [smem:[#allocation0]]
  $region22: #{intermediate_layer.1} parent=0
    _
  %s6 = ssub.s32 1, %s4
  %s7 = scalar_select 0, %s6, %s4
  $region1: #{intermediate_layer.1} parent=0
    #allocation2 [shape = 'u8[8192]{0}', space=vmem, size = 0x2000, scoped, tag = 'output window, operand 0, single buffered']
    #allocation3 [shape = 's32[1]{0}', space=sflag, size = 0x4, scoped, tag = 'scoped memory for intermediate_layer.1']
    %8 = vsyncpa [#allocation3], 0
    // Predicated region
    $region2: #{intermediate_layer.1} parent=1 // pred_check
      _
    $region3: #{intermediate_layer.1} parent=1 // pred_check_branch
      %10 = sbr.rel (0) target = $region5
    $region4: #{intermediate_layer.1} parent=1 // pred_region
      _
    $region5: #{intermediate_layer.1} parent=1 // pred_fallthru
      _
    // Predicated region
    $region6: #{intermediate_layer.1} parent=1 // pred_check
      _
    $region7: #{intermediate_layer.1} parent=1 // pred_check_branch
      %12 = sbr.rel (0) target = $region9
    $region8: #{intermediate_layer.1} parent=1 // pred_region
      _
    $region9: #{intermediate_layer.1} parent=1 // pred_fallthru
      _
    // Predicated region
    $region10: #{intermediate_layer.1} parent=1 // pred_check
      _
    $region11: #{intermediate_layer.1} parent=1 // pred_check_branch
      %14 = sbr.rel (0) target = $region13
    $region12: #{intermediate_layer.1} parent=1 // pred_region
      _
    $region13: #{intermediate_layer.1} parent=1 // pred_fallthru
      _
    %v15 = vld [vmem:[%s0] sm:$0xff]
    %v16 = vld [vmem:[%s0 + $0x8] sm:$0xff]
    %v17 = vld [vmem:[%s1] sm:$0xff]
    %v18 = vld [vmem:[%s1 + $0x8] sm:$0xff]
    %v19 = vld [vmem:[%s1 + $0x10] sm:$0xff]
    %v20 = vld [vmem:[%s1 + $0x18] sm:$0xff]
    %v21 = vld [vmem:[%s2] sm:$0x1]
    %v23 = vlaneseq
    %v24 = vshrl.u32 %v23, 7
    %v25 = vsub.s32 0, %v24
    %v26 = vrot.slane %v21, %v25
    %vm28 = vcmask 261120
    %v30 = vsel %vm28, %v15, 0
    %v33 = vsel %vm28, %v16, 0
    %35 = vmatprep.subr.mxu0 0.0
    %36 = vmatpush1.msra.mxu0 0.0
    %37 = vmatprep.subr.mxu0 0.0
    %38 = vmatpush1.msra.mxu0 0.0
    %39 = vmatprep.subr.mxu0 0.0
    %40 = vmatpush1.msra.mxu0 0.0
    %41 = vmatprep.subr.mxu0 0.0
    %42 = vmatpush1.msra.mxu0 0.0
    %43 = vmatprep.subr.mxu0 0.0
    %44 = vmatpush1.msra.mxu0 0.0
    %45 = vmatprep.subr.mxu0 0.0
    %46 = vmatpush1.msra.mxu0 0.0
    %47 = vmatprep.subr.mxu0 0.0
    %48 = vmatpush1.msra.mxu0 0.0
    %49 = vmatprep.subr.mxu0 0.0
    %50 = vmatpush1.msra.mxu0 0.0
    %51 = vmatprep.subr.mxu0 0.0
    %52 = vmatpush1.msra.mxu0 0.0
    %53 = vmatprep.subr.mxu0 0.0
    %54 = vmatpush1.msra.mxu0 0.0
    %55 = vmatprep.subr.mxu0 0.0
    %56 = vmatpush1.msra.mxu0 0.0
    %57 = vmatprep.subr.mxu0 0.0
    %58 = vmatpush1.msra.mxu0 0.0
    %59 = vmatprep.subr.mxu0 0.0
    %60 = vmatpush1.msra.mxu0 %v20
    %61 = vmatprep.subr.mxu0 0.0
    %62 = vmatpush1.msra.mxu0 %v19
    %63 = vmatprep.subr.mxu0 0.0
    %64 = vmatpush1.msra.mxu0 %v18
    %65 = vmatprep.subr.mxu0 0.0
    %66 = vmatpush1.msra.mxu0 %v17
    %67 = vmatprep.subr.mxu0 0.0
    %68 = vmatpush2.msra.mxu0 0.0
    %69 = vmatprep.subr.mxu0 0.0
    %70 = vmatpush2.msra.mxu0 0.0
    %71 = vmatprep.subr.mxu0 0.0
    %72 = vmatpush2.msra.mxu0 0.0
    %73 = vmatprep.subr.mxu0 0.0
    %74 = vmatpush2.msra.mxu0 0.0
    %75 = vmatprep.subr.mxu0 0.0
    %76 = vmatpush2.msra.mxu0 0.0
    %77 = vmatprep.subr.mxu0 0.0
    %78 = vmatpush2.msra.mxu0 0.0
    %79 = vmatprep.subr.mxu0 0.0
    %80 = vmatpush2.msra.mxu0 0.0
    %81 = vmatprep.subr.mxu0 0.0
    %82 = vmatpush2.msra.mxu0 0.0
    %83 = vmatprep.subr.mxu0 0.0
    %84 = vmatpush2.msra.mxu0 0.0
    %85 = vmatprep.subr.mxu0 0.0
    %86 = vmatpush2.msra.mxu0 0.0
    %87 = vmatprep.subr.mxu0 0.0
    %88 = vmatpush2.msra.mxu0 0.0
    %89 = vmatprep.subr.mxu0 0.0
    %90 = vmatpush2.msra.mxu0 0.0
    %91 = vmatprep.subr.mxu0 0.0
    %92 = vmatpush2.msra.mxu0 0.0
    %93 = vmatprep.subr.mxu0 0.0
    %94 = vmatpush2.msra.mxu0 0.0
    %95 = vmatprep.subr.mxu0 0.0
    %96 = vmatpush2.msra.mxu0 0.0
    %97 = vmatprep.subr.mxu0 0.0
    %98 = vmatpush2.msra.mxu0 0.0
    %99 = vmatprep.mubr.f32.mxu0 0.0
    %100 = vmatmul.mubr.f32.gmra.mxu0 %v30
    %v101 = vpop.f32.mrf.mxu0
    %v102 = vadd.f32 %v26, %v101
    %v103 = vpop.f32.mrf.mxu0
    %104 = vmatprep.mubr.f32.mxu0 0.0
    %105 = vmatmul.mubr.f32.gmra.mxu0 %v33
    %v106 = vpop.f32.mrf.mxu0
    %v107 = vadd.f32 %v26, %v106
    %v108 = vpop.f32.mrf.mxu0
    %109 = vdwg.mxu0
    %v110 = vmul.f32 %v102, 0.5
    %v111 = vmul.f32 %v107, 0.5
    %v112 = vmul.f32 %v102, 0.70710677
    %v113 = vmul.f32 %v107, 0.70710677
    %v114 = verf.f32.pop %v112
    %v115 = verf.f32.pop %v113
    %v116 = vadd.f32 %v114, 1.0
    %v117 = vadd.f32 %v115, 1.0
    %v118 = vmul.f32 %v110, %v116
    %v119 = vmul.f32 %v111, %v117
    %vm120 = vcmask 130048
    %121 = vst.msk [vmem:[#allocation2] sm:$0xff] %vm120, %v118
    %122 = vst.msk [vmem:[#allocation2 + $0x8] sm:$0xff] %vm120, %v119
    // Predicated region
    $region14: #{intermediate_layer.1} parent=1 // pred_check
      _
    $region15: #{intermediate_layer.1} parent=1 // pred_check_branch
      %124 = sbr.rel (0) target = $region17
    $region16: #{intermediate_layer.1} parent=1 // pred_region
      %s126 = ssub.s32 256, 256
      %127 = vsyncadd [#allocation3], %s126
      %s128 = sshll.u32 [#allocation2], 4
      %s129 = int_to_ptr.vmem [resolvable:$true] %s128
      %134 = dma.vmem_to_hbm [thread:$0]  %s129, 256, %s3, [#allocation3], 128, 128, 8
    $region17: #{intermediate_layer.1} parent=1 // pred_fallthru
      _
    // Predicated region
    $region18: #{intermediate_layer.1} parent=1 // pred_check
      _
    $region19: #{intermediate_layer.1} parent=1 // pred_check_branch
      %136 = sbr.rel (0) target = $region21
    $region20: #{intermediate_layer.1} parent=1 // pred_region
      %137 = dma.done [#allocation3], 256
    $region21: #{intermediate_layer.1} parent=1 // pred_fallthru
      _
    %138 = vsyncpa [#allocation3], 1

</llo_original>
